<compile_context>
chip_gen: v5e
topology: v5e:2x2
jax: 0.10.0
libtpu: 0.0.40
codegen_flags: <defaults>
</compile_context>

<pallas_src>
import math
from functools import partial

import jax
import jax.numpy as jnp
from jax import lax
from jax.experimental import pallas as pl
from jax.experimental.pallas import tpu as pltpu


def _layernorm_rows(x):
    # (R, n): (x - mean) / std over the last dim.
    # torch.std default is unbiased (ddof = 1), no epsilon (matches the reference).
    n = x.shape[-1]
    mu = jnp.sum(x, axis=-1, keepdims=True) * (1.0 / n)
    xc = x - mu
    var = jnp.sum(xc * xc, axis=-1, keepdims=True) * (1.0 / (n - 1))
    return xc * lax.rsqrt(var)


def transformer_kernel(seq_ref, emb_ref, w1_ref, w2_ref, readout_ref, out_ref, *, temp):
    # seq_ref:      (Bt, S, d_in)   current batch tile
    # emb_ref:      (d_in, d)       resident (constant index_map)
    # w1_ref/w2_ref:(d, d)          resident
    # readout_ref:  (1, d)          resident, lane-dense row
    # out_ref:      (1, 1, Bt)      lane-dense output block (batch along lanes)
    seq = seq_ref[...]
    emb = emb_ref[...]
    w1 = w1_ref[...]
    w2 = w2_ref[...]
    readout = readout_ref[...]

    Bt, S, d_in = seq.shape
    d = emb.shape[-1]

    # Precomputed reciprocal constants (single vmuls instead of vector divides).
    inv_sqrt_din = 1.0 / math.sqrt(d_in)
    inv_sqrt_d = 1.0 / math.sqrt(d)
    gram_scale = 1.0 / (float(d) * float(temp))   # fold /d and /temp
    inv_d = 1.0 / d                                # folded MLP scaling (ReLU homogeneity)
    inv_S = 1.0 / S

    # ---- embedding: one 2-D MXU matmul on flattened (Bt*S) rows ----
    seq2d = seq.reshape(Bt * S, d_in)
    inseq2d = jnp.dot(seq2d, emb, preferred_element_type=jnp.float32) * inv_sqrt_din
    inseq = inseq2d.reshape(Bt, S, d)

    # ---- self-attention with gram-matrix softmax (kept batched per-tile) ----
    g = jnp.einsum("bsd,btd->bst", inseq, inseq,
                   preferred_element_type=jnp.float32) * gram_scale
    g = g - jnp.max(g, axis=-1, keepdims=True)
    e = jnp.exp(g)
    inv_den = pl.reciprocal(jnp.sum(e, axis=-1, keepdims=True), approx=False)
    weights = e * inv_den
    attn = jnp.einsum("bst,btd->bsd", weights, inseq,
                      preferred_element_type=jnp.float32)

    post_attn2d = _layernorm_rows((inseq + attn).reshape(Bt * S, d))

    # ---- MLP: flattened 2-D matmuls; relu(x@W1/√d)@W2/√d == relu(x@W1)@W2 * (1/d) ----
    h = jnp.dot(post_attn2d, w1, preferred_element_type=jnp.float32)
    h = jnp.maximum(h, 0.0)
    h = jnp.dot(h, w2, preferred_element_type=jnp.float32) * inv_d
    h = _layernorm_rows(h + post_attn2d)

    # ---- mean over sequence, then lane-dense readout ----
    m = jnp.sum(h.reshape(Bt, S, d), axis=1) * inv_S                     # (Bt, d)
    # VPU multiply + lane reduction (no N=1 MXU pass), then a small XLU transpose so
    # the store is lane-dense (batch along the 128-lane axis).
    out_col = jnp.sum(m * readout, axis=-1, keepdims=True) * inv_sqrt_d  # (Bt, 1)
    out_ref[...] = jnp.transpose(out_col).reshape(1, 1, Bt)


def transformer_forward(seq, emb, w1, w2, readout, *, temp=1.0, block_b=128,
                        vmem_limit_bytes=None):
    """seq: (B, S, d_in) f32 -> (B,) f32  (matches the PyTorch forward for depth=1)."""
    B, S, d_in = seq.shape
    d = emb.shape[-1]

    bt = min(int(block_b), B)
    G = pl.cdiv(B, bt)
    b_pad = G * bt
    if b_pad != B:
        # Pad by repeating the last batch element (keeps layernorm finite in the
        # padded rows); padded outputs are discarded below.
        pad = b_pad - B
        seq = jnp.concatenate(
            [seq, jnp.broadcast_to(seq[-1:], (pad, S, d_in))], axis=0)

    kernel = partial(transformer_kernel, temp=float(temp))
    out3d = pl.pallas_call(
        kernel,
        out_shape=jax.ShapeDtypeStruct((G, 1, bt), jnp.float32),
        grid=(G,),
        in_specs=[
            pl.BlockSpec((bt, S, d_in), lambda i: (i, 0, 0)),   # pipelined batch tile
            pl.BlockSpec((d_in, d), lambda i: (0, 0)),          # resident weights
            pl.BlockSpec((d, d), lambda i: (0, 0)),
            pl.BlockSpec((d, d), lambda i: (0, 0)),
            pl.BlockSpec((1, d), lambda i: (0, 0)),
        ],
        out_specs=pl.BlockSpec((1, 1, bt), lambda i: (i, 0, 0)),
        compiler_params=pltpu.CompilerParams(
            dimension_semantics=("parallel",),        # megacore split on v7x
            vmem_limit_bytes=vmem_limit_bytes,
        ),
    )(seq, emb, w1, w2, readout.reshape(1, d))
    return out3d.reshape(b_pad)[:B]


def transformer_reference(seq, emb, w1, w2, readout, *, temp=1.0):
    """Pure-JAX mirror of the PyTorch forward (depth = 1), for validation."""
    def ln(x):
        n = x.shape[-1]
        mu = jnp.mean(x, axis=-1, keepdims=True)
        xc = x - mu
        var = jnp.sum(xc * xc, axis=-1, keepdims=True) / (n - 1)
        return xc / jnp.sqrt(var)

    d_in = seq.shape[-1]
    d = emb.shape[-1]
    inseq = seq @ emb / (d_in ** 0.5)
    gram = jnp.einsum("bsd,btd->bst", inseq, inseq) / inseq.shape[2]
    weights = jax.nn.softmax(gram / temp, axis=2)
    post_attn = ln(inseq + jnp.einsum("bst,btd->bsd", weights, inseq))
    h = post_attn @ w1 / (d ** 0.5)
    h = jnp.maximum(h, 0.0) @ w2 / (d ** 0.5)
    h = ln(h + post_attn)
    m = jnp.mean(h, axis=1)
    return m @ readout / (d ** 0.5)


if __name__ == "__main__":
    # Small shapes consistent with the module: batch=2, seqlen=8, d_in=16, d=32, depth=1
    B, S, D_IN, D = 2, 8, 16, 32
    TEMP, VU, VW, VV = 1.0, 1.0, 1.0, 1.0

    key = jax.random.PRNGKey(0)
    k_seq, k_emb, k_w1, k_w2, k_ro = jax.random.split(key, 5)

    seq = jax.random.normal(k_seq, (B, S, D_IN), dtype=jnp.float32)
    embedding = jax.random.normal(k_emb, (D_IN, D), dtype=jnp.float32) * math.sqrt(VU)
    W1 = jax.random.normal(k_w1, (D, D), dtype=jnp.float32) * math.sqrt(VW)
    W2 = jax.random.normal(k_w2, (D, D), dtype=jnp.float32) * math.sqrt(VW)
    readout = jax.random.normal(k_ro, (D,), dtype=jnp.float32) * math.sqrt(VV)
    # depth - 1 == 0, so no Us parameters are needed for depth = 1.

    out = transformer_forward(seq, embedding, W1, W2, readout, temp=TEMP)
    out = jax.block_until_ready(out)

    ref = transformer_reference(seq, embedding, W1, W2, readout, temp=TEMP)
    ref = jax.block_until_ready(ref)

    assert out.shape == (B,), f"unexpected output shape {out.shape}"
    assert jnp.allclose(out, ref, rtol=1e-4, atol=1e-4), (out, ref)

    print("KERNEL_OK")
</pallas_src>

<mosaic_0001>
module attributes {stable_mosaic.version = 11 : i64} {
  func.func @transformer_kernel(%arg0: i32, %arg1: memref<2x8x16xf32, #tpu.memory_space<vmem>>, %arg2: memref<16x32xf32, #tpu.memory_space<vmem>>, %arg3: memref<32x32xf32, #tpu.memory_space<vmem>>, %arg4: memref<32x32xf32, #tpu.memory_space<vmem>>, %arg5: memref<1x32xf32, #tpu.memory_space<vmem>>, %arg6: memref<1x1x2xf32, #tpu.memory_space<vmem>>) attributes {dimension_semantics = [#tpu.dimension_semantics<parallel>], iteration_bounds = array<i64: 1>, scalar_prefetch = 0 : i64, scratch_operands = 0 : i64, tpu.core_type = #tpu.core_type<tc>, window_params = [{transform_indices = @transform_0, window_bounds = array<i64: 2, 8, 16>}, {pipeline_mode = #tpu.pipeline_mode<synchronous>, transform_indices = @transform_1, window_bounds = array<i64: 16, 32>}, {pipeline_mode = #tpu.pipeline_mode<synchronous>, transform_indices = @transform_2, window_bounds = array<i64: 32, 32>}, {pipeline_mode = #tpu.pipeline_mode<synchronous>, transform_indices = @transform_3, window_bounds = array<i64: 32, 32>}, {pipeline_mode = #tpu.pipeline_mode<synchronous>, transform_indices = @transform_4, window_bounds = array<i64: 1, 32>}, {transform_indices = @transform_5, window_bounds = array<i64: 1, 1, 2>}]} {
    %c0 = arith.constant 0 : index
    %c0_0 = arith.constant 0 : index
    %c0_1 = arith.constant 0 : index
    %0 = vector.load %arg1[%c0, %c0_0, %c0_1] : memref<2x8x16xf32, #tpu.memory_space<vmem>>, vector<2x8x16xf32>
    %c0_2 = arith.constant 0 : index
    %c0_3 = arith.constant 0 : index
    %1 = vector.load %arg2[%c0_2, %c0_3] : memref<16x32xf32, #tpu.memory_space<vmem>>, vector<16x32xf32>
    %c0_4 = arith.constant 0 : index
    %c0_5 = arith.constant 0 : index
    %2 = vector.load %arg3[%c0_4, %c0_5] : memref<32x32xf32, #tpu.memory_space<vmem>>, vector<32x32xf32>
    %c0_6 = arith.constant 0 : index
    %c0_7 = arith.constant 0 : index
    %3 = vector.load %arg4[%c0_6, %c0_7] : memref<32x32xf32, #tpu.memory_space<vmem>>, vector<32x32xf32>
    %c0_8 = arith.constant 0 : index
    %c0_9 = arith.constant 0 : index
    %4 = vector.load %arg5[%c0_8, %c0_9] : memref<1x32xf32, #tpu.memory_space<vmem>>, vector<1x32xf32>
    %5 = vector.shape_cast %0 : vector<2x8x16xf32> to vector<16x16xf32>
    %cst = arith.constant dense<0.000000e+00> : vector<16x32xf32>
    %6 = tpu.matmul %5, %1, %cst {dimension_numbers = #tpu.dot_dimension_numbers<[1], [0], [0], [1], [0, 0, 1, 1], [], []>} : vector<16x16xf32>, vector<16x32xf32>, vector<16x32xf32> -> vector<16x32xf32>
    %cst_10 = arith.constant 2.500000e-01 : f32
    %7 = vector.broadcast %cst_10 : f32 to vector<16x32xf32>
    %8 = arith.mulf %6, %7 : vector<16x32xf32>
    %9 = vector.shape_cast %8 : vector<16x32xf32> to vector<2x8x32xf32>
    "tpu.trace_start"() <{level = 10 : i32, message = "bsd,btd->bst"}> : () -> ()
    %cst_11 = arith.constant dense<0.000000e+00> : vector<2x8x8xf32>
    %10 = tpu.matmul %9, %9, %cst_11 {dimension_numbers = #tpu.dot_dimension_numbers<[2], [2], [1], [1], [0, 0, 0, 1, 1, 1], [0], [0]>} : vector<2x8x32xf32>, vector<2x8x32xf32>, vector<2x8x8xf32> -> vector<2x8x8xf32>
    "tpu.trace_stop"() : () -> ()
    %cst_12 = arith.constant 3.125000e-02 : f32
    %11 = vector.broadcast %cst_12 : f32 to vector<2x8x8xf32>
    %12 = arith.mulf %10, %11 : vector<2x8x8xf32>
    %cst_13 = arith.constant dense<0xFF800000> : vector<2x8xf32>
    %13 = vector.multi_reduction <maximumf>, %12, %cst_13 [2] : vector<2x8x8xf32> to vector<2x8xf32>
    %14 = vector.shape_cast %13 : vector<2x8xf32> to vector<2x8x1xf32>
    %15 = vector.broadcast %14 : vector<2x8x1xf32> to vector<2x8x8xf32>
    %16 = arith.subf %12, %15 : vector<2x8x8xf32>
    %17 = math.exp %16 : vector<2x8x8xf32>
    %cst_14 = arith.constant dense<0.000000e+00> : vector<2x8xf32>
    %18 = vector.multi_reduction <add>, %17, %cst_14 [2] : vector<2x8x8xf32> to vector<2x8xf32>
    %19 = vector.shape_cast %18 : vector<2x8xf32> to vector<2x8x1xf32>
    %20 = tpu.reciprocal %19 : vector<2x8x1xf32> -> vector<2x8x1xf32>
    %21 = vector.broadcast %20 : vector<2x8x1xf32> to vector<2x8x8xf32>
    %22 = arith.mulf %17, %21 : vector<2x8x8xf32>
    "tpu.trace_start"() <{level = 10 : i32, message = "bst,btd->bsd"}> : () -> ()
    %cst_15 = arith.constant dense<0.000000e+00> : vector<2x8x32xf32>
    %23 = tpu.matmul %22, %9, %cst_15 {dimension_numbers = #tpu.dot_dimension_numbers<[2], [1], [1], [2], [0, 0, 0, 1, 1, 2], [0], [0]>} : vector<2x8x8xf32>, vector<2x8x32xf32>, vector<2x8x32xf32> -> vector<2x8x32xf32>
    "tpu.trace_stop"() : () -> ()
    %24 = arith.addf %9, %23 : vector<2x8x32xf32>
    %25 = vector.shape_cast %24 : vector<2x8x32xf32> to vector<16x32xf32>
    %cst_16 = arith.constant dense<0.000000e+00> : vector<16xf32>
    %26 = vector.multi_reduction <add>, %25, %cst_16 [1] : vector<16x32xf32> to vector<16xf32>
    %27 = vector.shape_cast %26 : vector<16xf32> to vector<16x1xf32>
    %cst_17 = arith.constant 3.125000e-02 : f32
    %28 = vector.broadcast %cst_17 : f32 to vector<16x1xf32>
    %29 = arith.mulf %27, %28 : vector<16x1xf32>
    %30 = vector.broadcast %29 : vector<16x1xf32> to vector<16x32xf32>
    %31 = arith.subf %25, %30 : vector<16x32xf32>
    %32 = arith.mulf %31, %31 : vector<16x32xf32>
    %cst_18 = arith.constant dense<0.000000e+00> : vector<16xf32>
    %33 = vector.multi_reduction <add>, %32, %cst_18 [1] : vector<16x32xf32> to vector<16xf32>
    %34 = vector.shape_cast %33 : vector<16xf32> to vector<16x1xf32>
    %cst_19 = arith.constant 0.0322580636 : f32
    %35 = vector.broadcast %cst_19 : f32 to vector<16x1xf32>
    %36 = arith.mulf %34, %35 : vector<16x1xf32>
    %37 = math.rsqrt %36 : vector<16x1xf32>
    %38 = vector.broadcast %37 : vector<16x1xf32> to vector<16x32xf32>
    %39 = arith.mulf %31, %38 : vector<16x32xf32>
    %cst_20 = arith.constant dense<0.000000e+00> : vector<16x32xf32>
    %40 = tpu.matmul %39, %2, %cst_20 {dimension_numbers = #tpu.dot_dimension_numbers<[1], [0], [0], [1], [0, 0, 1, 1], [], []>} : vector<16x32xf32>, vector<32x32xf32>, vector<16x32xf32> -> vector<16x32xf32>
    %cst_21 = arith.constant 0.000000e+00 : f32
    %41 = vector.broadcast %cst_21 : f32 to vector<16x32xf32>
    %42 = arith.maximumf %40, %41 : vector<16x32xf32>
    %cst_22 = arith.constant dense<0.000000e+00> : vector<16x32xf32>
    %43 = tpu.matmul %42, %3, %cst_22 {dimension_numbers = #tpu.dot_dimension_numbers<[1], [0], [0], [1], [0, 0, 1, 1], [], []>} : vector<16x32xf32>, vector<32x32xf32>, vector<16x32xf32> -> vector<16x32xf32>
    %cst_23 = arith.constant 3.125000e-02 : f32
    %44 = vector.broadcast %cst_23 : f32 to vector<16x32xf32>
    %45 = arith.mulf %43, %44 : vector<16x32xf32>
    %46 = arith.addf %45, %39 : vector<16x32xf32>
    %cst_24 = arith.constant dense<0.000000e+00> : vector<16xf32>
    %47 = vector.multi_reduction <add>, %46, %cst_24 [1] : vector<16x32xf32> to vector<16xf32>
    %48 = vector.shape_cast %47 : vector<16xf32> to vector<16x1xf32>
    %cst_25 = arith.constant 3.125000e-02 : f32
    %49 = vector.broadcast %cst_25 : f32 to vector<16x1xf32>
    %50 = arith.mulf %48, %49 : vector<16x1xf32>
    %51 = vector.broadcast %50 : vector<16x1xf32> to vector<16x32xf32>
    %52 = arith.subf %46, %51 : vector<16x32xf32>
    %53 = arith.mulf %52, %52 : vector<16x32xf32>
    %cst_26 = arith.constant dense<0.000000e+00> : vector<16xf32>
    %54 = vector.multi_reduction <add>, %53, %cst_26 [1] : vector<16x32xf32> to vector<16xf32>
    %55 = vector.shape_cast %54 : vector<16xf32> to vector<16x1xf32>
    %cst_27 = arith.constant 0.0322580636 : f32
    %56 = vector.broadcast %cst_27 : f32 to vector<16x1xf32>
    %57 = arith.mulf %55, %56 : vector<16x1xf32>
    %58 = math.rsqrt %57 : vector<16x1xf32>
    %59 = vector.broadcast %58 : vector<16x1xf32> to vector<16x32xf32>
    %60 = arith.mulf %52, %59 : vector<16x32xf32>
    %61 = vector.shape_cast %60 : vector<16x32xf32> to vector<2x8x32xf32>
    %cst_28 = arith.constant dense<0.000000e+00> : vector<2x32xf32>
    %62 = vector.multi_reduction <add>, %61, %cst_28 [1] : vector<2x8x32xf32> to vector<2x32xf32>
    %cst_29 = arith.constant 1.250000e-01 : f32
    %63 = vector.broadcast %cst_29 : f32 to vector<2x32xf32>
    %64 = arith.mulf %62, %63 : vector<2x32xf32>
    %65 = vector.broadcast %4 : vector<1x32xf32> to vector<2x32xf32>
    %66 = arith.mulf %64, %65 : vector<2x32xf32>
    %cst_30 = arith.constant dense<0.000000e+00> : vector<2xf32>
    %67 = vector.multi_reduction <add>, %66, %cst_30 [1] : vector<2x32xf32> to vector<2xf32>
    %68 = vector.shape_cast %67 : vector<2xf32> to vector<2x1xf32>
    %cst_31 = arith.constant 0.176776692 : f32
    %69 = vector.broadcast %cst_31 : f32 to vector<2x1xf32>
    %70 = arith.mulf %68, %69 : vector<2x1xf32>
    %71 = tpu.transpose %70, [1, 0] : vector<2x1xf32> -> vector<1x2xf32>
    %72 = vector.shape_cast %71 : vector<1x2xf32> to vector<1x1x2xf32>
    %c0_32 = arith.constant 0 : index
    %c0_33 = arith.constant 0 : index
    %c0_34 = arith.constant 0 : index
    %73 = vector.load %arg6[%c0_32, %c0_33, %c0_34] : memref<1x1x2xf32, #tpu.memory_space<vmem>>, vector<1x1x2xf32>
    tpu.vector_store %arg6[%c0_32, %c0_33, %c0_34], %72 {strides = array<i32>} : memref<1x1x2xf32, #tpu.memory_space<vmem>>, vector<1x1x2xf32>,
    return
  }
  func.func @transform_0(%arg0: i32) -> (i32, i32, i32) {
    %c0_i32 = arith.constant 0 : i32
    %c0_i32_0 = arith.constant 0 : i32
    %c0_i32_1 = arith.constant 0 : i32
    return %arg0, %c0_i32, %c0_i32_0 : i32, i32, i32
  }
  func.func @transform_1(%arg0: i32) -> (i32, i32) {
    %c0_i32 = arith.constant 0 : i32
    %c0_i32_0 = arith.constant 0 : i32
    %c0_i32_1 = arith.constant 0 : i32
    return %c0_i32, %c0_i32_0 : i32, i32
  }
  func.func @transform_2(%arg0: i32) -> (i32, i32) {
    %c0_i32 = arith.constant 0 : i32
    %c0_i32_0 = arith.constant 0 : i32
    %c0_i32_1 = arith.constant 0 : i32
    return %c0_i32, %c0_i32_0 : i32, i32
  }
  func.func @transform_3(%arg0: i32) -> (i32, i32) {
    %c0_i32 = arith.constant 0 : i32
    %c0_i32_0 = arith.constant 0 : i32
    %c0_i32_1 = arith.constant 0 : i32
    return %c0_i32, %c0_i32_0 : i32, i32
  }
  func.func @transform_4(%arg0: i32) -> (i32, i32) {
    %c0_i32 = arith.constant 0 : i32
    %c0_i32_0 = arith.constant 0 : i32
    %c0_i32_1 = arith.constant 0 : i32
    return %c0_i32, %c0_i32_0 : i32, i32
  }
  func.func @transform_5(%arg0: i32) -> (i32, i32, i32) {
    %c0_i32 = arith.constant 0 : i32
    %c0_i32_0 = arith.constant 0 : i32
    %c0_i32_1 = arith.constant 0 : i32
    return %arg0, %c0_i32, %c0_i32_0 : i32, i32, i32
  }
}

</mosaic_0001>

<llo_original>
// kernel: tpu_custom_call.1
$region0: #{tpu_custom_call.1}
  #allocation0 [shape = 'u32[]', space=smem, size = 0x4, offset = 0x4, fixed_abs, tag = 'smem constant byte address 0x4 - core index']
  #allocation1 [shape = 'u32[72,128]{1,0:T(1,128)}', space=vmem, size = 0x9000, scoped, tag = 'internal scratch']
  %s0 = inlined_call_operand.hbm [shape: f32[2,8,16], index: 0, kind: input, shape index: {}]
  %s1 = inlined_call_operand.hbm [shape: f32[16,32], index: 1, kind: input, shape index: {}]
  %s2 = inlined_call_operand.hbm [shape: f32[32,32], index: 2, kind: input, shape index: {}]
  %s3 = inlined_call_operand.hbm [shape: f32[32,32], index: 3, kind: input, shape index: {}]
  %s4 = inlined_call_operand.vmem [shape: f32[1,32], index: 4, kind: input, shape index: {}]
  %s5 = inlined_call_operand.hbm [shape: f32[1,1,2], index: 5, kind: output, shape index: {}]
  %s6 = sld [smem:[#allocation0]]
  $region46: #{tpu_custom_call.1} parent=0
    _
  %s8 = ssub.s32 1, %s6
  %s9 = scalar_select 0, %s8, %s6
  $region1: #{tpu_custom_call.1} parent=0
    #allocation2 [shape = 'u8[8192]{0}', space=vmem, size = 0x2000, scoped, tag = 'input window, operand 0, single buffered']
    #allocation3 [shape = 's32[1]{0}', space=sflag, size = 0x4, scoped, tag = 'scoped memory for tpu_custom_call.1']
    #allocation4 [shape = 's32[1]{0}', space=sflag, size = 0x4, scoped, tag = 'scoped memory for tpu_custom_call.1']
    #allocation5 [shape = 'u8[8192]{0}', space=vmem, size = 0x2000, scoped, tag = 'input window, operand 1, single buffered']
    #allocation6 [shape = 's32[1]{0}', space=sflag, size = 0x4, scoped, tag = 'scoped memory for tpu_custom_call.1']
    #allocation7 [shape = 'u8[16384]{0}', space=vmem, size = 0x4000, scoped, tag = 'input window, operand 2, single buffered']
    #allocation8 [shape = 'u8[16384]{0}', space=vmem, size = 0x4000, scoped, tag = 'input window, operand 3, single buffered']
    #allocation9 [shape = 's32[1]{0}', space=sflag, size = 0x4, scoped, tag = 'scoped memory for tpu_custom_call.1']
    #allocation10 [shape = 'u8[512]{0}', space=vmem, size = 0x400, scoped, tag = 'output window, operand 0, single buffered']
    %10 = vsyncpa [#allocation3], 0
    %11 = vsyncpa [#allocation6], 0
    %12 = vsyncpa [#allocation9], 0
    %13 = vsyncpa [#allocation4], 0
    // Predicated region
    $region2: #{tpu_custom_call.1} parent=1 // pred_check
      _
    $region3: #{tpu_custom_call.1} parent=1 // pred_check_branch
      %15 = sbr.rel (0) target = $region5
    $region4: #{tpu_custom_call.1} parent=1 // pred_region
      %17 = vsyncadd [#allocation3], 0
      %s18 = sshll.u32 %s0, 4
      %s19 = int_to_ptr.hbm [resolvable:$true] %s18
      %s20 = sshll.u32 [#allocation2], 4
      %s21 = int_to_ptr.vmem [resolvable:$true] %s20
      %26 = dma.hbm_to_vmem [thread:$0]  %s19, 256, %s21, [#allocation3], 128, 128, 8
    $region5: #{tpu_custom_call.1} parent=1 // pred_fallthru
      _
    // Predicated region
    $region6: #{tpu_custom_call.1} parent=1 // pred_check
      _
    $region7: #{tpu_custom_call.1} parent=1 // pred_check_branch
      %28 = sbr.rel (0) target = $region9
    $region8: #{tpu_custom_call.1} parent=1 // pred_region
      %30 = vsyncadd [#allocation6], 0
      %s31 = sshll.u32 %s1, 4
      %s32 = int_to_ptr.hbm [resolvable:$true] %s31
      %s33 = sshll.u32 [#allocation5], 4
      %s34 = int_to_ptr.vmem [resolvable:$true] %s33
      %39 = dma.hbm_to_vmem [thread:$0]  %s32, 256, %s34, [#allocation6], 128, 128, 8
    $region9: #{tpu_custom_call.1} parent=1 // pred_fallthru
      _
    // Predicated region
    $region10: #{tpu_custom_call.1} parent=1 // pred_check
      _
    $region11: #{tpu_custom_call.1} parent=1 // pred_check_branch
      %41 = sbr.rel (0) target = $region13
    $region12: #{tpu_custom_call.1} parent=1 // pred_region
      %43 = vsyncadd [#allocation6], 0
      %s44 = sshll.u32 %s2, 4
      %s45 = int_to_ptr.hbm [resolvable:$true] %s44
      %s46 = sshll.u32 [#allocation7], 4
      %s47 = int_to_ptr.vmem [resolvable:$true] %s46
      %52 = dma.hbm_to_vmem [thread:$0]  %s45, 512, %s47, [#allocation6], 128, 128, 8
    $region13: #{tpu_custom_call.1} parent=1 // pred_fallthru
      _
    // Predicated region
    $region14: #{tpu_custom_call.1} parent=1 // pred_check
      _
    $region15: #{tpu_custom_call.1} parent=1 // pred_check_branch
      %54 = sbr.rel (0) target = $region17
    $region16: #{tpu_custom_call.1} parent=1 // pred_region
      %56 = vsyncadd [#allocation9], 0
      %s57 = sshll.u32 %s3, 4
      %s58 = int_to_ptr.hbm [resolvable:$true] %s57
      %s59 = sshll.u32 [#allocation8], 4
      %s60 = int_to_ptr.vmem [resolvable:$true] %s59
      %65 = dma.hbm_to_vmem [thread:$0]  %s58, 512, %s60, [#allocation9], 128, 128, 8
    $region17: #{tpu_custom_call.1} parent=1 // pred_fallthru
      _
    // Predicated region
    $region18: #{tpu_custom_call.1} parent=1 // pred_check
      _
    $region19: #{tpu_custom_call.1} parent=1 // pred_check_branch
      %67 = sbr.rel (0) target = $region21
    $region20: #{tpu_custom_call.1} parent=1 // pred_region
      _
    $region21: #{tpu_custom_call.1} parent=1 // pred_fallthru
      _
    // Predicated region
    $region22: #{tpu_custom_call.1} parent=1 // pred_check
      _
    $region23: #{tpu_custom_call.1} parent=1 // pred_check_branch
      %69 = sbr.rel (0) target = $region25
    $region24: #{tpu_custom_call.1} parent=1 // pred_region
      %71 = dma.done [#allocation3], 256
    $region25: #{tpu_custom_call.1} parent=1 // pred_fallthru
      _
    // Predicated region
    $region26: #{tpu_custom_call.1} parent=1 // pred_check
      _
    $region27: #{tpu_custom_call.1} parent=1 // pred_check_branch
      %73 = sbr.rel (0) target = $region29
    $region28: #{tpu_custom_call.1} parent=1 // pred_region
      %75 = dma.done [#allocation6], 256
    $region29: #{tpu_custom_call.1} parent=1 // pred_fallthru
      _
    // Predicated region
    $region30: #{tpu_custom_call.1} parent=1 // pred_check
      _
    $region31: #{tpu_custom_call.1} parent=1 // pred_check_branch
      %77 = sbr.rel (0) target = $region33
    $region32: #{tpu_custom_call.1} parent=1 // pred_region
      %79 = dma.done [#allocation6], 512
    $region33: #{tpu_custom_call.1} parent=1 // pred_fallthru
      _
    // Predicated region
    $region34: #{tpu_custom_call.1} parent=1 // pred_check
      _
    $region35: #{tpu_custom_call.1} parent=1 // pred_check_branch
      %81 = sbr.rel (0) target = $region37
    $region36: #{tpu_custom_call.1} parent=1 // pred_region
      %83 = dma.done [#allocation9], 512
    $region37: #{tpu_custom_call.1} parent=1 // pred_fallthru
      _
    %v84 = vld [vmem:[#allocation2] sm:$0xff]
    %v85 = vld [vmem:[#allocation2 + $0x8] sm:$0xff]
    %v86 = vld [vmem:[#allocation5] sm:$0xff]
    %v87 = vld [vmem:[#allocation5 + $0x8] sm:$0xff]
    %v88 = vld [vmem:[#allocation7] sm:$0xff]
    %v89 = vld [vmem:[#allocation7 + $0x8] sm:$0xff]
    %v90 = vld [vmem:[#allocation7 + $0x10] sm:$0xff]
    %v91 = vld [vmem:[#allocation7 + $0x18] sm:$0xff]
    %v92 = vld [vmem:[#allocation8] sm:$0xff]
    %v93 = vld [vmem:[#allocation8 + $0x8] sm:$0xff]
    %v94 = vld [vmem:[#allocation8 + $0x10] sm:$0xff]
    %v95 = vld [vmem:[#allocation8 + $0x18] sm:$0xff]
    %v96 = vld [vmem:[%s4] sm:$0x1]
    %vm97 = vcmask 130048
    %v99 = vsel %vm97, %v84, 0
    %v102 = vsel %vm97, %v85, 0
    %104 = vmatpush.msra.mxu0 0.0
    %105 = vmatpush.msra.mxu0 0.0
    %106 = vmatpush.msra.mxu0 0.0
    %107 = vmatpush.msra.mxu0 0.0
    %108 = vmatpush.msra.mxu0 0.0
    %109 = vmatpush.msra.mxu0 0.0
    %110 = vmatpush.msra.mxu0 0.0
    %111 = vmatpush.msra.mxu0 0.0
    %112 = vmatpush.msra.mxu0 0.0
    %113 = vmatpush.msra.mxu0 0.0
    %114 = vmatpush.msra.mxu0 0.0
    %115 = vmatpush.msra.mxu0 0.0
    %116 = vmatpush.msra.mxu0 0.0
    %117 = vmatpush.msra.mxu0 0.0
    %118 = vmatpush.msra.mxu0 %v87
    %119 = vmatpush.msra.mxu0 %v86
    %120 = vmatmul.f32.gmra.mxu0 %v99
    %v121 = vpop.f32.mrf.mxu0
    %v122 = vadd.f32 0.0, %v121
    %123 = vmatmul.f32.gmra.mxu0 %v102
    %v124 = vpop.f32.mrf.mxu0
    %v125 = vadd.f32 0.0, %v124
    %126 = vdwg.mxu0
    %v127 = vmul.f32 %v122, 0.25
    %v128 = vmul.f32 %v125, 0.25
    %vm129 = vcmask 261120
    %v131 = vsel %vm129, %v127, 0
    %133 = vmatpush.xpose.msra.mxu0 0.0
    %134 = vmatpush.xpose.msra.mxu0 0.0
    %135 = vmatpush.xpose.msra.mxu0 0.0
    %136 = vmatpush.xpose.msra.mxu0 0.0
    %137 = vmatpush.xpose.msra.mxu0 0.0
    %138 = vmatpush.xpose.msra.mxu0 0.0
    %139 = vmatpush.xpose.msra.mxu0 0.0
    %140 = vmatpush.xpose.msra.mxu0 0.0
    %141 = vmatpush.xpose.msra.mxu0 0.0
    %142 = vmatpush.xpose.msra.mxu0 0.0
    %143 = vmatpush.xpose.msra.mxu0 0.0
    %144 = vmatpush.xpose.msra.mxu0 0.0
    %145 = vmatpush.xpose.msra.mxu0 0.0
    %146 = vmatpush.xpose.msra.mxu0 0.0
    %147 = vmatpush.xpose.msra.mxu0 0.0
    %148 = vmatpush.xpose.msra.mxu0 %v131
    %149 = vmatmul.f32.gmra.mxu0 %v131
    %v150 = vpop.f32.mrf.mxu0
    %v151 = vadd.f32 0.0, %v150
    %152 = vdwg.mxu0
    %v154 = vsel %vm129, %v128, 0
    %156 = vmatpush.xpose.msra.mxu0 0.0
    %157 = vmatpush.xpose.msra.mxu0 0.0
    %158 = vmatpush.xpose.msra.mxu0 0.0
    %159 = vmatpush.xpose.msra.mxu0 0.0
    %160 = vmatpush.xpose.msra.mxu0 0.0
    %161 = vmatpush.xpose.msra.mxu0 0.0
    %162 = vmatpush.xpose.msra.mxu0 0.0
    %163 = vmatpush.xpose.msra.mxu0 0.0
    %164 = vmatpush.xpose.msra.mxu0 0.0
    %165 = vmatpush.xpose.msra.mxu0 0.0
    %166 = vmatpush.xpose.msra.mxu0 0.0
    %167 = vmatpush.xpose.msra.mxu0 0.0
    %168 = vmatpush.xpose.msra.mxu0 0.0
    %169 = vmatpush.xpose.msra.mxu0 0.0
    %170 = vmatpush.xpose.msra.mxu0 0.0
    %171 = vmatpush.xpose.msra.mxu0 %v154
    %172 = vmatmul.f32.gmra.mxu0 %v154
    %v173 = vpop.f32.mrf.mxu0
    %v174 = vadd.f32 0.0, %v173
    %175 = vdwg.mxu0
    %v176 = vmul.f32 %v151, 0.03125
    %v177 = vmul.f32 %v174, 0.03125
    %vm178 = vcmask 64512
    %v179 = vsel %vm178, %v176, -inf
    %180 = vmax.xlane.f32.xlu0 %v179
    %v181 = vpop.xlane.xlu0 %180
    %v182 = vsel %vm178, %v177, -inf
    %183 = vmax.xlane.f32.xlu0 %v182
    %v184 = vpop.xlane.xlu0 %183
    %v185 = vsub.f32 %v176, %v181
    %v186 = vsub.f32 %v177, %v184
    %v187 = vmul.f32 %v185, 1.442695
    %v188 = vpow.pop %v187
    %v189 = vmul.f32 %v186, 1.442695
    %v190 = vpow.pop %v189
    %v191 = vsel %vm178, %v188, 0.0
    %192 = vadd.xlane.f32.xlu0 %v191
    %v193 = vpop.xlane.xlu0 %192
    %v194 = vsel %vm178, %v190, 0.0
    %195 = vadd.xlane.f32.xlu0 %v194
    %v196 = vpop.xlane.xlu0 %195
    %v197 = vrcp.pop %v193
    %v198 = vmul.f32 %v193, %v197
    %v199 = vsub.f32 1.0, %v198
    %v200 = vmul.f32 %v197, %v199
    %v201 = vadd.f32 %v197, %v200
    %vm202 = vweird.f32 %v193
    %vm203 = vweird.f32 %v197
    %vm204 = vmor %vm202, %vm203
    %v205 = vsel %vm204, %v197, %v201
    %v206 = vand.u32 2147483647, %v193
    %vm207 = vcmp.eq.f32.partialorder %v206, 8.507059e+37
    %v208 = vand.u32 %v193, 2147483648
    %v209 = vor.u32 1.1754944e-38, %v208
    %v210 = vsel %vm207, %v209, %v205
    %v211 = vrcp.pop %v196
    %v212 = vmul.f32 %v196, %v211
    %v213 = vsub.f32 1.0, %v212
    %v214 = vmul.f32 %v211, %v213
    %v215 = vadd.f32 %v211, %v214
    %vm216 = vweird.f32 %v196
    %vm217 = vweird.f32 %v211
    %vm218 = vmor %vm216, %vm217
    %v219 = vsel %vm218, %v211, %v215
    %v220 = vand.u32 2147483647, %v196
    %vm221 = vcmp.eq.f32.partialorder %v220, 8.507059e+37
    %v222 = vand.u32 %v196, 2147483648
    %v223 = vor.u32 1.1754944e-38, %v222
    %v224 = vsel %vm221, %v223, %v219
    %v225 = vmul.f32 %v188, %v210
    %v226 = vmul.f32 %v190, %v224
    %v228 = vsel %vm178, %v225, 0
    %230 = vmatpush.msra.mxu0 0.0
    %231 = vmatpush.msra.mxu0 0.0
    %232 = vmatpush.msra.mxu0 0.0
    %233 = vmatpush.msra.mxu0 0.0
    %234 = vmatpush.msra.mxu0 0.0
    %235 = vmatpush.msra.mxu0 0.0
    %236 = vmatpush.msra.mxu0 0.0
    %237 = vmatpush.msra.mxu0 0.0
    %238 = vmatpush.msra.mxu0 0.0
    %239 = vmatpush.msra.mxu0 0.0
    %240 = vmatpush.msra.mxu0 0.0
    %241 = vmatpush.msra.mxu0 0.0
    %242 = vmatpush.msra.mxu0 0.0
    %243 = vmatpush.msra.mxu0 0.0
    %244 = vmatpush.msra.mxu0 0.0
    %245 = vmatpush.msra.mxu0 %v127
    %246 = vmatmul.f32.gmra.mxu0 %v228
    %v247 = vpop.f32.mrf.mxu0
    %v248 = vadd.f32 0.0, %v247
    %249 = vdwg.mxu0
    %v251 = vsel %vm178, %v226, 0
    %253 = vmatpush.msra.mxu0 0.0
    %254 = vmatpush.msra.mxu0 0.0
    %255 = vmatpush.msra.mxu0 0.0
    %256 = vmatpush.msra.mxu0 0.0
    %257 = vmatpush.msra.mxu0 0.0
    %258 = vmatpush.msra.mxu0 0.0
    %259 = vmatpush.msra.mxu0 0.0
    %260 = vmatpush.msra.mxu0 0.0
    %261 = vmatpush.msra.mxu0 0.0
    %262 = vmatpush.msra.mxu0 0.0
    %263 = vmatpush.msra.mxu0 0.0
    %264 = vmatpush.msra.mxu0 0.0
    %265 = vmatpush.msra.mxu0 0.0
    %266 = vmatpush.msra.mxu0 0.0
    %267 = vmatpush.msra.mxu0 0.0
    %268 = vmatpush.msra.mxu0 %v128
    %269 = vmatmul.f32.gmra.mxu0 %v251
    %v270 = vpop.f32.mrf.mxu0
    %v271 = vadd.f32 0.0, %v270
    %272 = vdwg.mxu0
    %v273 = vadd.f32 %v127, %v248
    %v274 = vadd.f32 %v128, %v271
    %v275 = vsel %vm129, %v273, 0.0
    %276 = vadd.xlane.f32.xlu0 %v275
    %v277 = vpop.xlane.xlu0 %276
    %v278 = vsel %vm129, %v274, 0.0
    %279 = vadd.xlane.f32.xlu0 %v278
    %v280 = vpop.xlane.xlu0 %279
    %v281 = vmul.f32 %v277, 0.03125
    %v282 = vmul.f32 %v280, 0.03125
    %v283 = vsub.f32 %v273, %v281
    %v284 = vsub.f32 %v274, %v282
    %v285 = vmul.f32 %v283, %v283
    %v286 = vmul.f32 %v284, %v284
    %v287 = vsel %vm129, %v285, 0.0
    %288 = vadd.xlane.f32.xlu0 %v287
    %v289 = vpop.xlane.xlu0 %288
    %v290 = vsel %vm129, %v286, 0.0
    %291 = vadd.xlane.f32.xlu0 %v290
    %v292 = vpop.xlane.xlu0 %291
    %v293 = vmul.f32 %v289, 0.032258064
    %v294 = vmul.f32 %v292, 0.032258064
    %v295 = vrsqrt.pop %v293
    %v296 = vmul.f32 %v295, %v293
    %v297 = vmul.f32 %v296, %v295
    %v298 = vmul.f32 0.5, %v297
    %v299 = vsub.f32 1.5, %v298
    %v300 = vmul.f32 %v295, %v299
    %vm301 = vweird.f32 %v293
    %vm302 = vweird.f32 %v295
    %vm303 = vmor %vm301, %vm302
    %v304 = vsel %vm303, %v295, %v300
    %v305 = vrsqrt.pop %v294
    %v306 = vmul.f32 %v305, %v294
    %v307 = vmul.f32 %v306, %v305
    %v308 = vmul.f32 0.5, %v307
    %v309 = vsub.f32 1.5, %v308
    %v310 = vmul.f32 %v305, %v309
    %vm311 = vweird.f32 %v294
    %vm312 = vweird.f32 %v305
    %vm313 = vmor %vm311, %vm312
    %v314 = vsel %vm313, %v305, %v310
    %v315 = vmul.f32 %v283, %v304
    %v316 = vmul.f32 %v284, %v314
    %v318 = vsel %vm129, %v315, 0
    %v321 = vsel %vm129, %v316, 0
    %323 = vmatpush.msra.mxu0 0.0
    %324 = vmatpush.msra.mxu0 0.0
    %325 = vmatpush.msra.mxu0 0.0
    %326 = vmatpush.msra.mxu0 0.0
    %327 = vmatpush.msra.mxu0 0.0
    %328 = vmatpush.msra.mxu0 0.0
    %329 = vmatpush.msra.mxu0 0.0
    %330 = vmatpush.msra.mxu0 0.0
    %331 = vmatpush.msra.mxu0 0.0
    %332 = vmatpush.msra.mxu0 0.0
    %333 = vmatpush.msra.mxu0 0.0
    %334 = vmatpush.msra.mxu0 0.0
    %335 = vmatpush.msra.mxu0 %v91
    %336 = vmatpush.msra.mxu0 %v90
    %337 = vmatpush.msra.mxu0 %v89
    %338 = vmatpush.msra.mxu0 %v88
    %339 = vmatmul.f32.gmra.mxu0 %v318
    %v340 = vpop.f32.mrf.mxu0
    %v341 = vadd.f32 0.0, %v340
    %342 = vmatmul.f32.gmra.mxu0 %v321
    %v343 = vpop.f32.mrf.mxu0
    %v344 = vadd.f32 0.0, %v343
    %345 = vdwg.mxu0
    %v346 = vmax.f32 %v341, 0.0
    %v347 = vmax.f32 %v344, 0.0
    %v349 = vsel %vm129, %v346, 0
    %v352 = vsel %vm129, %v347, 0
    %354 = vmatpush.msra.mxu0 0.0
    %355 = vmatpush.msra.mxu0 0.0
    %356 = vmatpush.msra.mxu0 0.0
    %357 = vmatpush.msra.mxu0 0.0
    %358 = vmatpush.msra.mxu0 0.0
    %359 = vmatpush.msra.mxu0 0.0
    %360 = vmatpush.msra.mxu0 0.0
    %361 = vmatpush.msra.mxu0 0.0
    %362 = vmatpush.msra.mxu0 0.0
    %363 = vmatpush.msra.mxu0 0.0
    %364 = vmatpush.msra.mxu0 0.0
    %365 = vmatpush.msra.mxu0 0.0
    %366 = vmatpush.msra.mxu0 %v95
    %367 = vmatpush.msra.mxu0 %v94
    %368 = vmatpush.msra.mxu0 %v93
    %369 = vmatpush.msra.mxu0 %v92
    %370 = vmatmul.f32.gmra.mxu0 %v349
    %v371 = vpop.f32.mrf.mxu0
    %v372 = vadd.f32 0.0, %v371
    %373 = vmatmul.f32.gmra.mxu0 %v352
    %v374 = vpop.f32.mrf.mxu0
    %v375 = vadd.f32 0.0, %v374
    %376 = vdwg.mxu0
    %v377 = vmul.f32 %v372, 0.03125
    %v378 = vmul.f32 %v375, 0.03125
    %v379 = vadd.f32 %v377, %v315
    %v380 = vadd.f32 %v378, %v316
    %v381 = vsel %vm129, %v379, 0.0
    %382 = vadd.xlane.f32.xlu0 %v381
    %v383 = vpop.xlane.xlu0 %382
    %v384 = vsel %vm129, %v380, 0.0
    %385 = vadd.xlane.f32.xlu0 %v384
    %v386 = vpop.xlane.xlu0 %385
    %v387 = vmul.f32 %v383, 0.03125
    %v388 = vmul.f32 %v386, 0.03125
    %v389 = vsub.f32 %v379, %v387
    %v390 = vsub.f32 %v380, %v388
    %v391 = vmul.f32 %v389, %v389
    %v392 = vmul.f32 %v390, %v390
    %v393 = vsel %vm129, %v391, 0.0
    %394 = vadd.xlane.f32.xlu0 %v393
    %v395 = vpop.xlane.xlu0 %394
    %v396 = vsel %vm129, %v392, 0.0
    %397 = vadd.xlane.f32.xlu0 %v396
    %v398 = vpop.xlane.xlu0 %397
    %v399 = vmul.f32 %v395, 0.032258064
    %v400 = vmul.f32 %v398, 0.032258064
    %v401 = vrsqrt.pop %v399
    %v402 = vmul.f32 %v401, %v399
    %v403 = vmul.f32 %v402, %v401
    %v404 = vmul.f32 0.5, %v403
    %v405 = vsub.f32 1.5, %v404
    %v406 = vmul.f32 %v401, %v405
    %vm407 = vweird.f32 %v399
    %vm408 = vweird.f32 %v401
    %vm409 = vmor %vm407, %vm408
    %v410 = vsel %vm409, %v401, %v406
    %v411 = vrsqrt.pop %v400
    %v412 = vmul.f32 %v411, %v400
    %v413 = vmul.f32 %v412, %v411
    %v414 = vmul.f32 0.5, %v413
    %v415 = vsub.f32 1.5, %v414
    %v416 = vmul.f32 %v411, %v415
    %vm417 = vweird.f32 %v400
    %vm418 = vweird.f32 %v411
    %vm419 = vmor %vm417, %vm418
    %v420 = vsel %vm419, %v411, %v416
    %v421 = vmul.f32 %v389, %v410
    %v422 = vmul.f32 %v390, %v420
    %v423 = vsel %vm129, %v421, 0.0
    %v424 = vrot.slane %v423, 4
    %v425 = vadd.f32 %v423, %v424
    %v426 = vrot.slane %v425, 2
    %v427 = vadd.f32 %v425, %v426
    %v428 = vrot.slane %v427, 1
    %v429 = vadd.f32 %v427, %v428
    %v430 = vsel %vm129, %v422, 0.0
    %v431 = vrot.slane %v430, 4
    %v432 = vadd.f32 %v430, %v431
    %v433 = vrot.slane %v432, 2
    %v434 = vadd.f32 %v432, %v433
    %v435 = vrot.slane %v434, 1
    %v436 = vadd.f32 %v434, %v435
    %v437 = vmul.f32 %v429, 0.125
    %v438 = vmul.f32 %v436, 0.125
    %v440 = vperm.slane %v96, 0
    %v442 = vmul.f32 %v437, %v440
    %v443 = vmul.f32 %v438, %v440
    %v446 = vrot.slane %v443, 7
    %vm447 = vcmask 1041409
    %v448 = vsel %vm447, %v446, %v442
    %vm450 = vcmask 254976
    %v451 = vsel %vm450, %v448, 0.0
    %452 = vadd.xlane.f32.xlu0 %v451
    %v453 = vpop.xlane.xlu0 %452
    %v454 = vmul.f32 %v453, 0.17677669
    %455 = vxpose.xlu0.b32.start [1/16] %v454, 128
    %456 = vxpose.xlu0.b32.cont [2/16] 0.0, 128
    %457 = vxpose.xlu0.b32.cont [3/16] 0.0, 128
    %458 = vxpose.xlu0.b32.cont [4/16] 0.0, 128
    %459 = vxpose.xlu0.b32.cont [5/16] 0.0, 128
    %460 = vxpose.xlu0.b32.cont [6/16] 0.0, 128
    %461 = vxpose.xlu0.b32.cont [7/16] 0.0, 128
    %462 = vxpose.xlu0.b32.cont [8/16] 0.0, 128
    %463 = vxpose.xlu0.b32.cont [9/16] 0.0, 128
    %464 = vxpose.xlu0.b32.cont [10/16] 0.0, 128
    %465 = vxpose.xlu0.b32.cont [11/16] 0.0, 128
    %466 = vxpose.xlu0.b32.cont [12/16] 0.0, 128
    %467 = vxpose.xlu0.b32.cont [13/16] 0.0, 128
    %468 = vxpose.xlu0.b32.cont [14/16] 0.0, 128
    %469 = vxpose.xlu0.b32.cont [15/16] 0.0, 128
    %470 = vxpose.xlu0.b32.end [16/16] 0.0, 128
    %v471 = vpop.trf.xlu0
    %v472 = vpop.trf.xlu0
    %v473 = vpop.trf.xlu0
    %v474 = vpop.trf.xlu0
    %v475 = vpop.trf.xlu0
    %v476 = vpop.trf.xlu0
    %v477 = vpop.trf.xlu0
    %v478 = vpop.trf.xlu0
    %v479 = vpop.trf.xlu0
    %v480 = vpop.trf.xlu0
    %v481 = vpop.trf.xlu0
    %v482 = vpop.trf.xlu0
    %v483 = vpop.trf.xlu0
    %v484 = vpop.trf.xlu0
    %v485 = vpop.trf.xlu0
    %v486 = vpop.trf.xlu0
    %vm487 = vcmask 8192
    %488 = vst.msk [vmem:[#allocation10] sm:$0x1] %vm487, %v471
    // Predicated region
    $region38: #{tpu_custom_call.1} parent=1 // pred_check
      _
    $region39: #{tpu_custom_call.1} parent=1 // pred_check_branch
      %490 = sbr.rel (0) target = $region41
    $region40: #{tpu_custom_call.1} parent=1 // pred_region
      %492 = vsyncadd [#allocation4], 0
      %s494 = sshll.u32 [#allocation10], 4
      %s495 = int_to_ptr.vmem [resolvable:$true] %s494
      %s496 = sshll.u32 %s5, 4
      %s497 = int_to_ptr.hbm [resolvable:$true] %s496
      %499 = dma.vmem_to_hbm [thread:$0]  %s495, 16, %s497, [#allocation4]
    $region41: #{tpu_custom_call.1} parent=1 // pred_fallthru
      _
    // Predicated region
    $region42: #{tpu_custom_call.1} parent=1 // pred_check
      _
    $region43: #{tpu_custom_call.1} parent=1 // pred_check_branch
      %501 = sbr.rel (0) target = $region45
    $region44: #{tpu_custom_call.1} parent=1 // pred_region
      %503 = dma.done [#allocation4], 16
    $region45: #{tpu_custom_call.1} parent=1 // pred_fallthru
      _
    %504 = vsyncpa [#allocation3], 1
    %505 = vsyncpa [#allocation6], 1
    %506 = vsyncpa [#allocation9], 1
    %507 = vsyncpa [#allocation4], 1

</llo_original>
